<compile_context>
chip_gen: v5e
topology: v5e:2x2
jax: 0.10.0
libtpu: 0.0.40
codegen_flags: <defaults>
</compile_context>

<pallas_src>
import functools

import jax
import jax.numpy as jnp
from jax import lax
from jax.experimental import pallas as pl
from jax.experimental.pallas import tpu as pltpu


_OUT_SUB, _OUT_LANE = 8, 128  # lane-dense partial-sum tile (one full vreg)


def _round_up(x, m):
    return (x + m - 1) // m * m


def _distill_partial_kernel(s_ref, t_ref, lab_ref, ce_ref, kl_ref,
                            *, n_valid_rows, inv_T):
    """Per-row-tile partial sums of CE and (un-normalized) KL."""
    s = s_ref[...].astype(jnp.float32)            # (tb, C)
    t = t_ref[...].astype(jnp.float32)            # (tb, C)
    lab = lab_ref[...]                            # (tb, 1) int32
    tb, C = s.shape

    # ---- student log-sum-exp (shared by CE and the T-scaled branch) ----
    s_max = jnp.max(s, axis=-1, keepdims=True)                      # (tb, 1)
    d = s - s_max                                                   # (tb, C)
    lse = jnp.log(jnp.sum(jnp.exp(d), axis=-1, keepdims=True))      # (tb, 1)

    # ---- CrossEntropy per row: logsumexp(s) - s[label] ----
    col = lax.broadcasted_iota(jnp.int32, (tb, C), 1)
    s_label = jnp.sum(jnp.where(col == lab, s, 0.0),
                      axis=-1, keepdims=True)                       # (tb, 1)
    ce_row = (s_max + lse) - s_label                                # (tb, 1)

    # ---- KL(softmax(t/T) || softmax(s/T)) per row ----
    # max(s/T) == max(s)/T for T > 0, so reuse d = s - max(s): no 2nd XLU max.
    dT = d * inv_T
    log_p_s = dT - jnp.log(jnp.sum(jnp.exp(dT), axis=-1, keepdims=True))

    t_max = jnp.max(t, axis=-1, keepdims=True)
    dTt = (t - t_max) * inv_T
    e_t = jnp.exp(dTt)                                              # (tb, C)
    t_sum = jnp.sum(e_t, axis=-1, keepdims=True)                    # (tb, 1)
    log_p_t = dTt - jnp.log(t_sum)
    # sum_c p_t*(log p_t - log p_s) == (sum_c e_t*(log p_t - log p_s)) / t_sum
    kl_row = (jnp.sum(e_t * (log_p_t - log_p_s), axis=-1, keepdims=True)
              * pl.reciprocal(t_sum, approx=False))                 # (tb, 1)

    # ---- mask padded rows (zero-padded batch tail) ----
    row_id = pl.program_id(0) * tb + lax.broadcasted_iota(jnp.int32, (tb, 1), 0)
    valid = (row_id < n_valid_rows).astype(jnp.float32)

    ce_partial = jnp.sum(ce_row * valid)
    kl_partial = jnp.sum(kl_row * valid)

    # Lane-dense, full-vreg stores; the wrapper reads element [i, 0, 0].
    ce_ref[...] = jnp.broadcast_to(ce_partial, (1, _OUT_SUB, _OUT_LANE)).astype(jnp.float32)
    kl_ref[...] = jnp.broadcast_to(kl_partial, (1, _OUT_SUB, _OUT_LANE)).astype(jnp.float32)


def distill_loss(s_logits, t_logits, labels, *, alpha, T, tile_b=256):
    """s_logits, t_logits: (B, C) float; labels: (B,) int. Returns scalar f32."""
    B, C = s_logits.shape
    itemsize = jnp.dtype(s_logits.dtype).itemsize

    # Row-tile size: biggest tile whose double-buffered working set
    # (2 logit inputs x 2 buffers) stays well inside scoped VMEM on every
    # generation (v7x: 64 MiB physical / 32 MiB default scoped).
    budget = 16 * 1024 * 1024
    bytes_per_row = 2 * 2 * C * itemsize
    max_rows = max(8, (budget // max(bytes_per_row, 1)) // 8 * 8)
    tb = int(min(tile_b, max_rows, _round_up(B, 8)))
    tb = max(8, (tb // 8) * 8)

    B_pad = _round_up(B, tb)
    n_tiles = B_pad // tb

    if B_pad != B:
        pad = B_pad - B
        s_logits = jnp.pad(s_logits, ((0, pad), (0, 0)))
        t_logits = jnp.pad(t_logits, ((0, pad), (0, 0)))
        labels = jnp.pad(labels, ((0, pad),))
    labels2d = labels.astype(jnp.int32).reshape(B_pad, 1)

    kernel = functools.partial(_distill_partial_kernel,
                               n_valid_rows=B, inv_T=float(1.0 / T))

    ce_parts, kl_parts = pl.pallas_call(
        kernel,
        out_shape=(
            jax.ShapeDtypeStruct((n_tiles, _OUT_SUB, _OUT_LANE), jnp.float32),
            jax.ShapeDtypeStruct((n_tiles, _OUT_SUB, _OUT_LANE), jnp.float32),
        ),
        grid=(n_tiles,),
        in_specs=[
            pl.BlockSpec((tb, C), lambda i: (i, 0)),
            pl.BlockSpec((tb, C), lambda i: (i, 0)),
            pl.BlockSpec((tb, 1), lambda i: (i, 0)),
        ],
        out_specs=(
            pl.BlockSpec((1, _OUT_SUB, _OUT_LANE), lambda i: (i, 0, 0)),
            pl.BlockSpec((1, _OUT_SUB, _OUT_LANE), lambda i: (i, 0, 0)),
        ),
        compiler_params=pltpu.CompilerParams(
            dimension_semantics=("parallel",)),
    )(s_logits, t_logits, labels2d)

    inv_B = 1.0 / B
    ce = jnp.sum(ce_parts[:, 0, 0]) * inv_B
    kl = jnp.sum(kl_parts[:, 0, 0]) * inv_B * (T * T)
    return alpha * ce + (1.0 - alpha) * kl


def _reference(s_logits, t_logits, labels, *, alpha, T):
    # Pure-JAX reference mirroring the PyTorch module.
    s = s_logits.astype(jnp.float32)
    t = t_logits.astype(jnp.float32)
    B = s.shape[0]
    log_p = jax.nn.log_softmax(s, axis=-1)
    ce = -jnp.mean(jnp.take_along_axis(log_p, labels[:, None].astype(jnp.int32), axis=-1))
    log_ps = jax.nn.log_softmax(s / T, axis=-1)
    pt = jax.nn.softmax(t / T, axis=-1)
    kl = jnp.sum(pt * (jnp.log(pt) - log_ps)) / B * T * T
    return alpha * ce + (1.0 - alpha) * kl


if __name__ == "__main__":
    alpha, T = 0.5, 2.0
    B, C = 100, 384        # B not a multiple of the tile -> exercises padding/masking
    tile_b = 64            # -> 2 grid steps

    key = jax.random.PRNGKey(0)
    k1, k2, k3 = jax.random.split(key, 3)
    s_logits = jax.random.normal(k1, (B, C), dtype=jnp.float32)
    t_logits = jax.random.normal(k2, (B, C), dtype=jnp.float32)
    labels = jax.random.randint(k3, (B,), 0, C, dtype=jnp.int32)

    loss = distill_loss(s_logits, t_logits, labels, alpha=alpha, T=T, tile_b=tile_b)
    jax.block_until_ready(loss)

    ref = _reference(s_logits, t_logits, labels, alpha=alpha, T=T)
    assert jnp.allclose(loss, ref, rtol=1e-5, atol=1e-4), (loss, ref)

    print("KERNEL_OK")
</pallas_src>

<mosaic_0001>
module attributes {stable_mosaic.version = 11 : i64} {
  func.func @_distill_partial_kernel(%arg0: i32, %arg1: memref<64x384xf32, #tpu.memory_space<vmem>>, %arg2: memref<64x384xf32, #tpu.memory_space<vmem>>, %arg3: memref<64x1xi32, #tpu.memory_space<vmem>>, %arg4: memref<1x8x128xf32, #tpu.memory_space<vmem>>, %arg5: memref<1x8x128xf32, #tpu.memory_space<vmem>>) attributes {dimension_semantics = [#tpu.dimension_semantics<parallel>], iteration_bounds = array<i64: 2>, scalar_prefetch = 0 : i64, scratch_operands = 0 : i64, tpu.core_type = #tpu.core_type<tc>, window_params = [{transform_indices = @transform_0, window_bounds = array<i64: 64, 384>}, {transform_indices = @transform_1, window_bounds = array<i64: 64, 384>}, {transform_indices = @transform_2, window_bounds = array<i64: 64, 1>}, {transform_indices = @transform_3, window_bounds = array<i64: 1, 8, 128>}, {transform_indices = @transform_4, window_bounds = array<i64: 1, 8, 128>}]} {
    %c0 = arith.constant 0 : index
    %c0_0 = arith.constant 0 : index
    %0 = vector.load %arg1[%c0, %c0_0] : memref<64x384xf32, #tpu.memory_space<vmem>>, vector<64x384xf32>
    %c0_1 = arith.constant 0 : index
    %c0_2 = arith.constant 0 : index
    %1 = vector.load %arg2[%c0_1, %c0_2] : memref<64x384xf32, #tpu.memory_space<vmem>>, vector<64x384xf32>
    %c0_3 = arith.constant 0 : index
    %c0_4 = arith.constant 0 : index
    %2 = vector.load %arg3[%c0_3, %c0_4] : memref<64x1xi32, #tpu.memory_space<vmem>>, vector<64x1xi32>
    %cst = arith.constant dense<0xFF800000> : vector<64xf32>
    %3 = vector.multi_reduction <maximumf>, %0, %cst [1] : vector<64x384xf32> to vector<64xf32>
    %4 = vector.shape_cast %3 : vector<64xf32> to vector<64x1xf32>
    %5 = vector.broadcast %4 : vector<64x1xf32> to vector<64x384xf32>
    %6 = arith.subf %0, %5 : vector<64x384xf32>
    %7 = math.exp %6 : vector<64x384xf32>
    %cst_5 = arith.constant dense<0.000000e+00> : vector<64xf32>
    %8 = vector.multi_reduction <add>, %7, %cst_5 [1] : vector<64x384xf32> to vector<64xf32>
    %9 = vector.shape_cast %8 : vector<64xf32> to vector<64x1xf32>
    %10 = math.log %9 : vector<64x1xf32>
    %11 = tpu.iota {dimensions = array<i32: 1>} : vector<64x384xi32>
    %12 = vector.broadcast %2 : vector<64x1xi32> to vector<64x384xi32>
    %13 = arith.cmpi eq, %11, %12 : vector<64x384xi32>
    %cst_6 = arith.constant 0.000000e+00 : f32
    %14 = vector.broadcast %cst_6 : f32 to vector<64x384xf32>
    %15 = arith.select %13, %0, %14 : vector<64x384xi1>, vector<64x384xf32>
    %cst_7 = arith.constant dense<0.000000e+00> : vector<64xf32>
    %16 = vector.multi_reduction <add>, %15, %cst_7 [1] : vector<64x384xf32> to vector<64xf32>
    %17 = vector.shape_cast %16 : vector<64xf32> to vector<64x1xf32>
    %18 = arith.addf %4, %10 : vector<64x1xf32>
    %19 = arith.subf %18, %17 : vector<64x1xf32>
    %cst_8 = arith.constant 5.000000e-01 : f32
    %20 = vector.broadcast %cst_8 : f32 to vector<64x384xf32>
    %21 = arith.mulf %6, %20 : vector<64x384xf32>
    %22 = math.exp %21 : vector<64x384xf32>
    %cst_9 = arith.constant dense<0.000000e+00> : vector<64xf32>
    %23 = vector.multi_reduction <add>, %22, %cst_9 [1] : vector<64x384xf32> to vector<64xf32>
    %24 = vector.shape_cast %23 : vector<64xf32> to vector<64x1xf32>
    %25 = math.log %24 : vector<64x1xf32>
    %26 = vector.broadcast %25 : vector<64x1xf32> to vector<64x384xf32>
    %27 = arith.subf %21, %26 : vector<64x384xf32>
    %cst_10 = arith.constant dense<0xFF800000> : vector<64xf32>
    %28 = vector.multi_reduction <maximumf>, %1, %cst_10 [1] : vector<64x384xf32> to vector<64xf32>
    %29 = vector.shape_cast %28 : vector<64xf32> to vector<64x1xf32>
    %30 = vector.broadcast %29 : vector<64x1xf32> to vector<64x384xf32>
    %31 = arith.subf %1, %30 : vector<64x384xf32>
    %cst_11 = arith.constant 5.000000e-01 : f32
    %32 = vector.broadcast %cst_11 : f32 to vector<64x384xf32>
    %33 = arith.mulf %31, %32 : vector<64x384xf32>
    %34 = math.exp %33 : vector<64x384xf32>
    %cst_12 = arith.constant dense<0.000000e+00> : vector<64xf32>
    %35 = vector.multi_reduction <add>, %34, %cst_12 [1] : vector<64x384xf32> to vector<64xf32>
    %36 = vector.shape_cast %35 : vector<64xf32> to vector<64x1xf32>
    %37 = math.log %36 : vector<64x1xf32>
    %38 = vector.broadcast %37 : vector<64x1xf32> to vector<64x384xf32>
    %39 = arith.subf %33, %38 : vector<64x384xf32>
    %40 = arith.subf %39, %27 : vector<64x384xf32>
    %41 = arith.mulf %34, %40 : vector<64x384xf32>
    %cst_13 = arith.constant dense<0.000000e+00> : vector<64xf32>
    %42 = vector.multi_reduction <add>, %41, %cst_13 [1] : vector<64x384xf32> to vector<64xf32>
    %43 = vector.shape_cast %42 : vector<64xf32> to vector<64x1xf32>
    %44 = tpu.reciprocal %36 : vector<64x1xf32> -> vector<64x1xf32>
    %45 = arith.mulf %43, %44 : vector<64x1xf32>
    %c64_i32 = arith.constant 64 : i32
    %46 = arith.muli %arg0, %c64_i32 : i32
    %47 = tpu.iota {dimensions = array<i32: 0>} : vector<64x1xi32>
    %48 = vector.broadcast %46 : i32 to vector<64x1xi32>
    %49 = arith.addi %48, %47 : vector<64x1xi32>
    %c100_i32 = arith.constant 100 : i32
    %50 = vector.broadcast %c100_i32 : i32 to vector<64x1xi32>
    %51 = arith.cmpi slt, %49, %50 : vector<64x1xi32>
    %52 = arith.extui %51 : vector<64x1xi1> to vector<64x1xi32>
    %53 = arith.sitofp %52 : vector<64x1xi32> to vector<64x1xf32>
    %54 = arith.mulf %19, %53 : vector<64x1xf32>
    %55 = vector.shape_cast %54 : vector<64x1xf32> to vector<1x64x1xf32>
    %cst_14 = arith.constant dense<0.000000e+00> : vector<1xf32>
    %56 = vector.multi_reduction <add>, %55, %cst_14 [1, 2] : vector<1x64x1xf32> to vector<1xf32>
    %57 = vector.shape_cast %56 : vector<1xf32> to vector<1x1x1xf32>
    %58 = vector.extract %57[0, 0, 0] : f32 from vector<1x1x1xf32>
    %59 = arith.mulf %45, %53 : vector<64x1xf32>
    %60 = vector.shape_cast %59 : vector<64x1xf32> to vector<1x64x1xf32>
    %cst_15 = arith.constant dense<0.000000e+00> : vector<1xf32>
    %61 = vector.multi_reduction <add>, %60, %cst_15 [1, 2] : vector<1x64x1xf32> to vector<1xf32>
    %62 = vector.shape_cast %61 : vector<1xf32> to vector<1x1x1xf32>
    %63 = vector.extract %62[0, 0, 0] : f32 from vector<1x1x1xf32>
    %64 = vector.broadcast %58 : f32 to vector<1x8x128xf32>
    %c0_16 = arith.constant 0 : index
    %c0_17 = arith.constant 0 : index
    %c0_18 = arith.constant 0 : index
    %65 = vector.load %arg4[%c0_16, %c0_17, %c0_18] : memref<1x8x128xf32, #tpu.memory_space<vmem>>, vector<1x8x128xf32>
    tpu.vector_store %arg4[%c0_16, %c0_17, %c0_18], %64 {strides = array<i32>} : memref<1x8x128xf32, #tpu.memory_space<vmem>>, vector<1x8x128xf32>,
    %66 = vector.broadcast %63 : f32 to vector<1x8x128xf32>
    %c0_19 = arith.constant 0 : index
    %c0_20 = arith.constant 0 : index
    %c0_21 = arith.constant 0 : index
    %67 = vector.load %arg5[%c0_19, %c0_20, %c0_21] : memref<1x8x128xf32, #tpu.memory_space<vmem>>, vector<1x8x128xf32>
    tpu.vector_store %arg5[%c0_19, %c0_20, %c0_21], %66 {strides = array<i32>} : memref<1x8x128xf32, #tpu.memory_space<vmem>>, vector<1x8x128xf32>,
    return
  }
  func.func @transform_0(%arg0: i32) -> (i32, i32) {
    %c0_i32 = arith.constant 0 : i32
    %c0_i32_0 = arith.constant 0 : i32
    return %arg0, %c0_i32 : i32, i32
  }
  func.func @transform_1(%arg0: i32) -> (i32, i32) {
    %c0_i32 = arith.constant 0 : i32
    %c0_i32_0 = arith.constant 0 : i32
    return %arg0, %c0_i32 : i32, i32
  }
  func.func @transform_2(%arg0: i32) -> (i32, i32) {
    %c0_i32 = arith.constant 0 : i32
    %c0_i32_0 = arith.constant 0 : i32
    return %arg0, %c0_i32 : i32, i32
  }
  func.func @transform_3(%arg0: i32) -> (i32, i32, i32) {
    %c0_i32 = arith.constant 0 : i32
    %c0_i32_0 = arith.constant 0 : i32
    %c0_i32_1 = arith.constant 0 : i32
    return %arg0, %c0_i32, %c0_i32_0 : i32, i32, i32
  }
  func.func @transform_4(%arg0: i32) -> (i32, i32, i32) {
    %c0_i32 = arith.constant 0 : i32
    %c0_i32_0 = arith.constant 0 : i32
    %c0_i32_1 = arith.constant 0 : i32
    return %arg0, %c0_i32, %c0_i32_0 : i32, i32, i32
  }
}

</mosaic_0001>

<llo_original>
// kernel: tpu_custom_call.1
$region0: #{tpu_custom_call.1}
  #allocation0 [shape = 'u32[]', space=smem, size = 0x4, offset = 0x4, fixed_abs, tag = 'smem constant byte address 0x4 - core index']
  #allocation1 [shape = 'u32[72,128]{1,0:T(1,128)}', space=vmem, size = 0x9000, scoped, tag = 'internal scratch']
  %s0 = inlined_call_operand.hbm [shape: f32[128,384], index: 0, kind: input, shape index: {}]
  %s1 = inlined_call_operand.hbm [shape: f32[128,384], index: 1, kind: input, shape index: {}]
  %s2 = inlined_call_operand.vmem [shape: s32[128,1], index: 2, kind: input, shape index: {}]
  %s3 = inlined_call_operand.hbm [shape: f32[2,8,128], index: 3, kind: output, shape index: {0}]
  %s4 = inlined_call_operand.hbm [shape: f32[2,8,128], index: 4, kind: output, shape index: {1}]
  %5 = xla_tuple %s3, %s4
  %s6 = sld [smem:[#allocation0]]
  $region61: #{tpu_custom_call.1} parent=0
    _
  %s8 = ssub.s32 1, %s6
  %s9 = scalar_select 0, %s8, %s6
  $region1: #{tpu_custom_call.1} parent=0
    #allocation2 [shape = 'u8[196608]{0}', space=vmem, size = 0x30000, scoped, tag = 'input window, operand 0']
    #allocation3 [shape = 's32[2]{0}', space=sflag, size = 0x8, scoped, tag = 'scoped memory for tpu_custom_call.1']
    #allocation4 [shape = 's32[2]{0}', space=sflag, size = 0x8, scoped, tag = 'scoped memory for tpu_custom_call.1']
    #allocation5 [shape = 'u8[196608]{0}', space=vmem, size = 0x30000, scoped, tag = 'input window, operand 1']
    #allocation6 [shape = 's32[2]{0}', space=sflag, size = 0x8, scoped, tag = 'scoped memory for tpu_custom_call.1']
    #allocation7 [shape = 'u8[8192]{0}', space=vmem, size = 0x2000, scoped, tag = 'output window, operand 0']
    #allocation8 [shape = 'u8[8192]{0}', space=vmem, size = 0x2000, scoped, tag = 'output window, operand 1']
    #allocation9 [shape = 's32[2]{0}', space=sflag, size = 0x8, scoped, tag = 'scoped memory for tpu_custom_call.1']
    %10 = vsyncpa [#allocation3], 0
    %s11 = scalar_lea.sflag [#allocation3], 1
    %12 = vsyncpa %s11, 0
    %13 = vsyncpa [#allocation6], 0
    %s14 = scalar_lea.sflag [#allocation6], 1
    %15 = vsyncpa %s14, 0
    %16 = vsyncpa [#allocation4], 0
    %s17 = scalar_lea.sflag [#allocation4], 1
    %18 = vsyncpa %s17, 0
    %19 = vsyncpa [#allocation9], 0
    %s20 = scalar_lea.sflag [#allocation9], 1
    %21 = vsyncpa %s20, 0
    loop: start=0, step=1, limit=4
    $region2: #{tpu_custom_call.1} parent=1 // loop_pre_header
      _
    $region3: #{tpu_custom_call.1} parent=1 // loop_header
      %s23 = sphi 0, %s27
      %p24 = scmp.ge.s32.totalorder %s23, 4
      %s33 = sphi 0, %s35
      %s36 = sphi 0, %s33
      %s37 = sphi 0, %s36
      %s53 = sphi 0, %s37
      %s59 = sphi 0, %s61
      %s62 = sphi 0, %s59
      %s63 = sphi 0, %s62
      %s79 = sphi 0, %s63
      %s85 = sphi 0, %s87
      %s88 = sphi 0, %s85
      %s89 = sphi 0, %s88
      %s105 = sphi 0, %s89
      %s111 = sphi 0, %s113
      %s114 = sphi 0, %s111
      %s115 = sphi 0, %s114
      %s131 = sphi 0, %s115
      %s137 = sphi 0, %s139
      %s140 = sphi 0, %s137
      %s141 = sphi 0, %s140
      %s157 = sphi 0, %s141
    $region4: #{tpu_custom_call.1} parent=1 // loop_header_branch
      %26 = sbr.rel (%p24) target = $region8
    $region5: #{tpu_custom_call.1} parent=1 // loop_body
      %s28 = ssub.s32 %s23, 1
      %s29 = ssub.s32 %s23, 2
      %s30 = sadd.s32 %s23, 1
      %s31 = ssub.s32 %s23, %s30
      %p32 = scmp.eq.s32.totalorder %s31, 0
      %s34 = sadd.s32 %s33, 1
      %s35 = scalar_select %p32, %s33, %s34
      %p38 = pneg %p32
      %p39 = scmp.eq.s32.totalorder %s23, 1
      %p40 = por %p38, %p39
      %p41 = scmp.ne.s32.totalorder %s33, %s36
      %p42 = scmp.eq.s32.totalorder %s23, 0
      %p43 = por %p41, %p42
      %p44 = scmp.ne.s32.totalorder %s33, %s36
      %p45 = scmp.eq.s32.totalorder %s28, 1
      %p46 = por %p44, %p45
      %p47 = scmp.ne.s32.totalorder %s36, %s37
      %p48 = scmp.eq.s32.totalorder %s28, 0
      %p49 = por %p47, %p48
      %p50 = scmp.ne.s32.totalorder %s36, %s37
      %p51 = scmp.eq.s32.totalorder %s29, 1
      %p52 = por %p50, %p51
      %p54 = scmp.ne.s32.totalorder %s37, %s53
      %p55 = scmp.eq.s32.totalorder %s29, 0
      %p56 = por %p54, %p55
      %s57 = ssub.s32 %s23, %s30
      %p58 = scmp.eq.s32.totalorder %s57, 0
      %s60 = sadd.s32 %s59, 1
      %s61 = scalar_select %p58, %s59, %s60
      %p64 = pneg %p58
      %p65 = scmp.eq.s32.totalorder %s23, 1
      %p66 = por %p64, %p65
      %p67 = scmp.ne.s32.totalorder %s59, %s62
      %p68 = scmp.eq.s32.totalorder %s23, 0
      %p69 = por %p67, %p68
      %p70 = scmp.ne.s32.totalorder %s59, %s62
      %p71 = scmp.eq.s32.totalorder %s28, 1
      %p72 = por %p70, %p71
      %p73 = scmp.ne.s32.totalorder %s62, %s63
      %p74 = scmp.eq.s32.totalorder %s28, 0
      %p75 = por %p73, %p74
      %p76 = scmp.ne.s32.totalorder %s62, %s63
      %p77 = scmp.eq.s32.totalorder %s29, 1
      %p78 = por %p76, %p77
      %p80 = scmp.ne.s32.totalorder %s63, %s79
      %p81 = scmp.eq.s32.totalorder %s29, 0
      %p82 = por %p80, %p81
      %s83 = ssub.s32 %s23, %s30
      %p84 = scmp.eq.s32.totalorder %s83, 0
      %s86 = sadd.s32 %s85, 1
      %s87 = scalar_select %p84, %s85, %s86
      %p90 = pneg %p84
      %p91 = scmp.eq.s32.totalorder %s23, 1
      %p92 = por %p90, %p91
      %p93 = scmp.ne.s32.totalorder %s85, %s88
      %p94 = scmp.eq.s32.totalorder %s23, 0
      %p95 = por %p93, %p94
      %p96 = scmp.ne.s32.totalorder %s85, %s88
      %p97 = scmp.eq.s32.totalorder %s28, 1
      %p98 = por %p96, %p97
      %p99 = scmp.ne.s32.totalorder %s88, %s89
      %p100 = scmp.eq.s32.totalorder %s28, 0
      %p101 = por %p99, %p100
      %p102 = scmp.ne.s32.totalorder %s88, %s89
      %p103 = scmp.eq.s32.totalorder %s29, 1
      %p104 = por %p102, %p103
      %p106 = scmp.ne.s32.totalorder %s89, %s105
      %p107 = scmp.eq.s32.totalorder %s29, 0
      %p108 = por %p106, %p107
      %s109 = ssub.s32 %s23, %s30
      %p110 = scmp.eq.s32.totalorder %s109, 0
      %s112 = sadd.s32 %s111, 1
      %s113 = scalar_select %p110, %s111, %s112
      %p116 = pneg %p110
      %p117 = scmp.eq.s32.totalorder %s23, 1
      %p118 = por %p116, %p117
      %p119 = scmp.ne.s32.totalorder %s111, %s114
      %p120 = scmp.eq.s32.totalorder %s23, 0
      %p121 = por %p119, %p120
      %p122 = scmp.ne.s32.totalorder %s111, %s114
      %p123 = scmp.eq.s32.totalorder %s28, 1
      %p124 = por %p122, %p123
      %p125 = scmp.ne.s32.totalorder %s114, %s115
      %p126 = scmp.eq.s32.totalorder %s28, 0
      %p127 = por %p125, %p126
      %p128 = scmp.ne.s32.totalorder %s114, %s115
      %p129 = scmp.eq.s32.totalorder %s29, 1
      %p130 = por %p128, %p129
      %p132 = scmp.ne.s32.totalorder %s115, %s131
      %p133 = scmp.eq.s32.totalorder %s29, 0
      %p134 = por %p132, %p133
      %s135 = ssub.s32 %s23, %s30
      %p136 = scmp.eq.s32.totalorder %s135, 0
      %s138 = sadd.s32 %s137, 1
      %s139 = scalar_select %p136, %s137, %s138
      %p142 = pneg %p136
      %p143 = scmp.eq.s32.totalorder %s23, 1
      %p144 = por %p142, %p143
      %p145 = scmp.ne.s32.totalorder %s137, %s140
      %p146 = scmp.eq.s32.totalorder %s23, 0
      %p147 = por %p145, %p146
      %p148 = scmp.ne.s32.totalorder %s137, %s140
      %p149 = scmp.eq.s32.totalorder %s28, 1
      %p150 = por %p148, %p149
      %p151 = scmp.ne.s32.totalorder %s140, %s141
      %p152 = scmp.eq.s32.totalorder %s28, 0
      %p153 = por %p151, %p152
      %p154 = scmp.ne.s32.totalorder %s140, %s141
      %p155 = scmp.eq.s32.totalorder %s29, 1
      %p156 = por %p154, %p155
      %p158 = scmp.ne.s32.totalorder %s141, %s157
      %p159 = scmp.eq.s32.totalorder %s29, 0
      %p160 = por %p158, %p159
      %p161 = scmp.le.s32.totalorder 1, %s23
      %p162 = scmp.lt.s32.totalorder %s23, 3
      %p163 = pnand %p161, %p162
      %p164 = pneg %p163
      // Predicated region
      $region9: #{tpu_custom_call.1} parent=5 // pred_check
        _
      $region10: #{tpu_custom_call.1} parent=5 // pred_check_branch
        %166 = sbr.rel (%p163) target = $region12
      $region11: #{tpu_custom_call.1} parent=5 // pred_region
        %s167 = ssub.s32 %s23, 1
      $region12: #{tpu_custom_call.1} parent=5 // pred_fallthru
        _
      %p168 = scmp.lt.s32.totalorder %s23, 2
      // Predicated region
      $region13: #{tpu_custom_call.1} parent=5 // pred_check
        %p169 = pneg %p168
      $region14: #{tpu_custom_call.1} parent=5 // pred_check_branch
        %171 = sbr.rel (%p169) target = $region16
      $region15: #{tpu_custom_call.1} parent=5 // pred_region
        // Predicated region
        $region17: #{tpu_custom_call.1} parent=15 // pred_check
          %p172 = pneg %p43
        $region18: #{tpu_custom_call.1} parent=15 // pred_check_branch
          %174 = sbr.rel (%p172) target = $region20
        $region19: #{tpu_custom_call.1} parent=15 // pred_region
          %s175 = sand.u32 %s33, 1
          %s176 = scalar_lea.sflag [#allocation3], %s175
          %s177 = sand.u32 %s33, 1
          %s178 = smul.addr %s177, 192
          %s179 = scalar_lea.vmem [#allocation2], %s178
          %s180 = smul.u32 8, %s23
          %182 = vsyncadd %s176, 0
          %s183 = smul.addr %s180, 3
          %s184 = smul.addr %s183, 8
          %s185 = scalar_lea.hbm %s0, %s184
          %s186 = sshll.u32 %s185, 4
          %s187 = int_to_ptr.hbm [resolvable:$true] %s186
          %s188 = sshll.u32 %s179, 4
          %s189 = int_to_ptr.vmem [resolvable:$true] %s188
          %194 = dma.hbm_to_vmem [thread:$0]  %s187, 3072, %s189, %s176, 384, 384, 24
        $region20: #{tpu_custom_call.1} parent=15 // pred_fallthru
          _
        // Predicated region
        $region21: #{tpu_custom_call.1} parent=15 // pred_check
          %p195 = pneg %p69
        $region22: #{tpu_custom_call.1} parent=15 // pred_check_branch
          %197 = sbr.rel (%p195) target = $region24
        $region23: #{tpu_custom_call.1} parent=15 // pred_region
          %s198 = sand.u32 %s59, 1
          %s199 = scalar_lea.sflag [#allocation6], %s198
          %s200 = sand.u32 %s59, 1
          %s201 = smul.addr %s200, 192
          %s202 = scalar_lea.vmem [#allocation5], %s201
          %s203 = smul.u32 8, %s23
          %205 = vsyncadd %s199, 0
          %s206 = smul.addr %s203, 3
          %s207 = smul.addr %s206, 8
          %s208 = scalar_lea.hbm %s1, %s207
          %s209 = sshll.u32 %s208, 4
          %s210 = int_to_ptr.hbm [resolvable:$true] %s209
          %s211 = sshll.u32 %s202, 4
          %s212 = int_to_ptr.vmem [resolvable:$true] %s211
          %217 = dma.hbm_to_vmem [thread:$0]  %s210, 3072, %s212, %s199, 384, 384, 24
        $region24: #{tpu_custom_call.1} parent=15 // pred_fallthru
          _
        // Predicated region
        $region25: #{tpu_custom_call.1} parent=15 // pred_check
          %p218 = pneg %p95
        $region26: #{tpu_custom_call.1} parent=15 // pred_check_branch
          %220 = sbr.rel (%p218) target = $region28
        $region27: #{tpu_custom_call.1} parent=15 // pred_region
          %s221 = smul.u32 8, %s23
          %p222 = scmp.lt.s32.totalorder %s221, 15
          %s223 = scalar_select %p222, %s221, 15
          %s224 = smul.addr %s223, 8
          %s225 = scalar_lea.vmem %s2, %s224
          %s226 = smul.u32 8, %s23
        $region28: #{tpu_custom_call.1} parent=15 // pred_fallthru
          _
      $region16: #{tpu_custom_call.1} parent=5 // pred_fallthru
        _
      %p227 = scmp.le.s32.totalorder 1, %s23
      %p228 = scmp.lt.s32.totalorder %s23, 3
      %p229 = pnand %p227, %p228
      %p230 = pneg %p229
      // Predicated region
      $region29: #{tpu_custom_call.1} parent=5 // pred_check
        _
      $region30: #{tpu_custom_call.1} parent=5 // pred_check_branch
        %232 = sbr.rel (%p229) target = $region32
      $region31: #{tpu_custom_call.1} parent=5 // pred_region
        %s233 = ssub.s32 %s23, 1
        %s234 = sand.u32 %s36, 1
        %s235 = scalar_lea.sflag [#allocation3], %s234
        %s236 = sand.u32 %s36, 1
        %s237 = smul.addr %s236, 192
        %s238 = scalar_lea.vmem [#allocation2], %s237
        // Predicated region
        $region33: #{tpu_custom_call.1} parent=31 // pred_check
          %p239 = pneg %p49
        $region34: #{tpu_custom_call.1} parent=31 // pred_check_branch
          %241 = sbr.rel (%p239) target = $region36
        $region35: #{tpu_custom_call.1} parent=31 // pred_region
          %243 = dma.done %s235, 3072
        $region36: #{tpu_custom_call.1} parent=31 // pred_fallthru
          _
        %s244 = sand.u32 %s62, 1
        %s245 = scalar_lea.sflag [#allocation6], %s244
        %s246 = sand.u32 %s62, 1
        %s247 = smul.addr %s246, 192
        %s248 = scalar_lea.vmem [#allocation5], %s247
        // Predicated region
        $region37: #{tpu_custom_call.1} parent=31 // pred_check
          %p249 = pneg %p75
        $region38: #{tpu_custom_call.1} parent=31 // pred_check_branch
          %251 = sbr.rel (%p249) target = $region40
        $region39: #{tpu_custom_call.1} parent=31 // pred_region
          %253 = dma.done %s245, 3072
        $region40: #{tpu_custom_call.1} parent=31 // pred_fallthru
          _
        %s254 = sand.u32 %s36, 1
        %s255 = scalar_lea.sflag [#allocation3], %s254
        %s256 = sand.u32 %s36, 1
        %s257 = smul.addr %s256, 192
        %s258 = scalar_lea.vmem [#allocation2], %s257
        %p259 = pneg %p49
        %p260 = pneg %p46
        %s261 = sand.u32 %s62, 1
        %s262 = scalar_lea.sflag [#allocation6], %s261
        %s263 = sand.u32 %s62, 1
        %s264 = smul.addr %s263, 192
        %s265 = scalar_lea.vmem [#allocation5], %s264
        %p266 = pneg %p75
        %p267 = pneg %p72
        %s268 = smul.u32 8, %s28
        %p269 = scmp.lt.s32.totalorder %s268, 15
        %s270 = scalar_select %p269, %s268, 15
        %s271 = smul.addr %s270, 8
        %s272 = scalar_lea.vmem %s2, %s271
        %p273 = pneg %p101
        %p274 = pneg %p98
        %p275 = pneg %p127
        %p276 = pneg %p124
        %s277 = sand.u32 %s114, 1
        %s278 = scalar_lea.sflag [#allocation4], %s277
        %s279 = sand.u32 %s114, 1
        %s280 = smul.addr %s279, 8
        %s281 = scalar_lea.vmem [#allocation7], %s280
        %p282 = pneg %p153
        %p283 = pneg %p150
        %s284 = sand.u32 %s140, 1
        %s285 = scalar_lea.sflag [#allocation9], %s284
        %s286 = sand.u32 %s140, 1
        %s287 = smul.addr %s286, 8
        %s288 = scalar_lea.vmem [#allocation8], %s287
        %s289 = smul.u32 8, %s28
        %s290 = smul.u32 8, %s28
        %s291 = smul.u32 8, %s28
        %p292 = scmp.lt.s32.totalorder %s291, 15
        %s293 = scalar_select %p292, %s291, 15
        %s294 = smul.addr %s293, 8
        %s295 = scalar_lea.vmem %s2, %s294
        %s296 = smul.u32 8, %s28
        %v297 = vld [vmem:[%s238] sm:$0xff]
        %v298 = vld [vmem:[%s238 + $0x8] sm:$0xff]
        %v299 = vld [vmem:[%s238 + $0x10] sm:$0xff]
        %v300 = vld [vmem:[%s238 + $0x18] sm:$0xff]
        %v301 = vld [vmem:[%s238 + $0x20] sm:$0xff]
        %v302 = vld [vmem:[%s238 + $0x28] sm:$0xff]
        %v303 = vld [vmem:[%s238 + $0x30] sm:$0xff]
        %v304 = vld [vmem:[%s238 + $0x38] sm:$0xff]
        %v305 = vld [vmem:[%s238 + $0x40] sm:$0xff]
        %v306 = vld [vmem:[%s238 + $0x48] sm:$0xff]
        %v307 = vld [vmem:[%s238 + $0x50] sm:$0xff]
        %v308 = vld [vmem:[%s238 + $0x58] sm:$0xff]
        %v309 = vld [vmem:[%s238 + $0x60] sm:$0xff]
        %v310 = vld [vmem:[%s238 + $0x68] sm:$0xff]
        %v311 = vld [vmem:[%s238 + $0x70] sm:$0xff]
        %v312 = vld [vmem:[%s238 + $0x78] sm:$0xff]
        %v313 = vld [vmem:[%s238 + $0x80] sm:$0xff]
        %v314 = vld [vmem:[%s238 + $0x88] sm:$0xff]
        %v315 = vld [vmem:[%s238 + $0x90] sm:$0xff]
        %v316 = vld [vmem:[%s238 + $0x98] sm:$0xff]
        %v317 = vld [vmem:[%s238 + $0xa0] sm:$0xff]
        %v318 = vld [vmem:[%s238 + $0xa8] sm:$0xff]
        %v319 = vld [vmem:[%s238 + $0xb0] sm:$0xff]
        %v320 = vld [vmem:[%s238 + $0xb8] sm:$0xff]
        %v321 = vld [vmem:[%s248] sm:$0xff]
        %v322 = vld [vmem:[%s248 + $0x8] sm:$0xff]
        %v323 = vld [vmem:[%s248 + $0x10] sm:$0xff]
        %v324 = vld [vmem:[%s248 + $0x18] sm:$0xff]
        %v325 = vld [vmem:[%s248 + $0x20] sm:$0xff]
        %v326 = vld [vmem:[%s248 + $0x28] sm:$0xff]
        %v327 = vld [vmem:[%s248 + $0x30] sm:$0xff]
        %v328 = vld [vmem:[%s248 + $0x38] sm:$0xff]
        %v329 = vld [vmem:[%s248 + $0x40] sm:$0xff]
        %v330 = vld [vmem:[%s248 + $0x48] sm:$0xff]
        %v331 = vld [vmem:[%s248 + $0x50] sm:$0xff]
        %v332 = vld [vmem:[%s248 + $0x58] sm:$0xff]
        %v333 = vld [vmem:[%s248 + $0x60] sm:$0xff]
        %v334 = vld [vmem:[%s248 + $0x68] sm:$0xff]
        %v335 = vld [vmem:[%s248 + $0x70] sm:$0xff]
        %v336 = vld [vmem:[%s248 + $0x78] sm:$0xff]
        %v337 = vld [vmem:[%s248 + $0x80] sm:$0xff]
        %v338 = vld [vmem:[%s248 + $0x88] sm:$0xff]
        %v339 = vld [vmem:[%s248 + $0x90] sm:$0xff]
        %v340 = vld [vmem:[%s248 + $0x98] sm:$0xff]
        %v341 = vld [vmem:[%s248 + $0xa0] sm:$0xff]
        %v342 = vld [vmem:[%s248 + $0xa8] sm:$0xff]
        %v343 = vld [vmem:[%s248 + $0xb0] sm:$0xff]
        %v344 = vld [vmem:[%s248 + $0xb8] sm:$0xff]
        %v345 = vld [vmem:[%s295] sm:$0xff]
        %v346 = vld [vmem:[%s295 + $0x8] sm:$0xff]
        %v347 = vld [vmem:[%s295 + $0x10] sm:$0xff]
        %v348 = vld [vmem:[%s295 + $0x18] sm:$0xff]
        %v349 = vld [vmem:[%s295 + $0x20] sm:$0xff]
        %v350 = vld [vmem:[%s295 + $0x28] sm:$0xff]
        %v351 = vld [vmem:[%s295 + $0x30] sm:$0xff]
        %v352 = vld [vmem:[%s295 + $0x38] sm:$0xff]
        %v353 = vmax.f32 %v297, %v298
        %v354 = vmax.f32 %v353, %v299
        %355 = vmax.xlane.f32.xlu0 %v354
        %v356 = vpop.xlane.xlu0 %355
        %v357 = vmax.f32 %v300, %v301
        %v358 = vmax.f32 %v357, %v302
        %359 = vmax.xlane.f32.xlu0 %v358
        %v360 = vpop.xlane.xlu0 %359
        %v361 = vmax.f32 %v303, %v304
        %v362 = vmax.f32 %v361, %v305
        %363 = vmax.xlane.f32.xlu0 %v362
        %v364 = vpop.xlane.xlu0 %363
        %v365 = vmax.f32 %v306, %v307
        %v366 = vmax.f32 %v365, %v308
        %367 = vmax.xlane.f32.xlu0 %v366
        %v368 = vpop.xlane.xlu0 %367
        %v369 = vmax.f32 %v309, %v310
        %v370 = vmax.f32 %v369, %v311
        %371 = vmax.xlane.f32.xlu0 %v370
        %v372 = vpop.xlane.xlu0 %371
        %v373 = vmax.f32 %v312, %v313
        %v374 = vmax.f32 %v373, %v314
        %375 = vmax.xlane.f32.xlu0 %v374
        %v376 = vpop.xlane.xlu0 %375
        %v377 = vmax.f32 %v315, %v316
        %v378 = vmax.f32 %v377, %v317
        %379 = vmax.xlane.f32.xlu0 %v378
        %v380 = vpop.xlane.xlu0 %379
        %v381 = vmax.f32 %v318, %v319
        %v382 = vmax.f32 %v381, %v320
        %383 = vmax.xlane.f32.xlu0 %v382
        %v384 = vpop.xlane.xlu0 %383
        %v385 = vsub.f32 %v297, %v356
        %v386 = vsub.f32 %v298, %v356
        %v387 = vsub.f32 %v299, %v356
        %v388 = vsub.f32 %v300, %v360
        %v389 = vsub.f32 %v301, %v360
        %v390 = vsub.f32 %v302, %v360
        %v391 = vsub.f32 %v303, %v364
        %v392 = vsub.f32 %v304, %v364
        %v393 = vsub.f32 %v305, %v364
        %v394 = vsub.f32 %v306, %v368
        %v395 = vsub.f32 %v307, %v368
        %v396 = vsub.f32 %v308, %v368
        %v397 = vsub.f32 %v309, %v372
        %v398 = vsub.f32 %v310, %v372
        %v399 = vsub.f32 %v311, %v372
        %v400 = vsub.f32 %v312, %v376
        %v401 = vsub.f32 %v313, %v376
        %v402 = vsub.f32 %v314, %v376
        %v403 = vsub.f32 %v315, %v380
        %v404 = vsub.f32 %v316, %v380
        %v405 = vsub.f32 %v317, %v380
        %v406 = vsub.f32 %v318, %v384
        %v407 = vsub.f32 %v319, %v384
        %v408 = vsub.f32 %v320, %v384
        %v409 = vmul.f32 %v385, 1.442695
        %v410 = vpow.pop %v409
        %v411 = vmul.f32 %v386, 1.442695
        %v412 = vpow.pop %v411
        %v413 = vmul.f32 %v387, 1.442695
        %v414 = vpow.pop %v413
        %v415 = vmul.f32 %v388, 1.442695
        %v416 = vpow.pop %v415
        %v417 = vmul.f32 %v389, 1.442695
        %v418 = vpow.pop %v417
        %v419 = vmul.f32 %v390, 1.442695
        %v420 = vpow.pop %v419
        %v421 = vmul.f32 %v391, 1.442695
        %v422 = vpow.pop %v421
        %v423 = vmul.f32 %v392, 1.442695
        %v424 = vpow.pop %v423
        %v425 = vmul.f32 %v393, 1.442695
        %v426 = vpow.pop %v425
        %v427 = vmul.f32 %v394, 1.442695
        %v428 = vpow.pop %v427
        %v429 = vmul.f32 %v395, 1.442695
        %v430 = vpow.pop %v429
        %v431 = vmul.f32 %v396, 1.442695
        %v432 = vpow.pop %v431
        %v433 = vmul.f32 %v397, 1.442695
        %v434 = vpow.pop %v433
        %v435 = vmul.f32 %v398, 1.442695
        %v436 = vpow.pop %v435
        %v437 = vmul.f32 %v399, 1.442695
        %v438 = vpow.pop %v437
        %v439 = vmul.f32 %v400, 1.442695
        %v440 = vpow.pop %v439
        %v441 = vmul.f32 %v401, 1.442695
        %v442 = vpow.pop %v441
        %v443 = vmul.f32 %v402, 1.442695
        %v444 = vpow.pop %v443
        %v445 = vmul.f32 %v403, 1.442695
        %v446 = vpow.pop %v445
        %v447 = vmul.f32 %v404, 1.442695
        %v448 = vpow.pop %v447
        %v449 = vmul.f32 %v405, 1.442695
        %v450 = vpow.pop %v449
        %v451 = vmul.f32 %v406, 1.442695
        %v452 = vpow.pop %v451
        %v453 = vmul.f32 %v407, 1.442695
        %v454 = vpow.pop %v453
        %v455 = vmul.f32 %v408, 1.442695
        %v456 = vpow.pop %v455
        %v457 = vadd.f32 %v410, %v412
        %v458 = vadd.f32 %v457, %v414
        %459 = vadd.xlane.f32.xlu0 %v458
        %v460 = vpop.xlane.xlu0 %459
        %v461 = vadd.f32 %v416, %v418
        %v462 = vadd.f32 %v461, %v420
        %463 = vadd.xlane.f32.xlu0 %v462
        %v464 = vpop.xlane.xlu0 %463
        %v465 = vadd.f32 %v422, %v424
        %v466 = vadd.f32 %v465, %v426
        %467 = vadd.xlane.f32.xlu0 %v466
        %v468 = vpop.xlane.xlu0 %467
        %v469 = vadd.f32 %v428, %v430
        %v470 = vadd.f32 %v469, %v432
        %471 = vadd.xlane.f32.xlu0 %v470
        %v472 = vpop.xlane.xlu0 %471
        %v473 = vadd.f32 %v434, %v436
        %v474 = vadd.f32 %v473, %v438
        %475 = vadd.xlane.f32.xlu0 %v474
        %v476 = vpop.xlane.xlu0 %475
        %v477 = vadd.f32 %v440, %v442
        %v478 = vadd.f32 %v477, %v444
        %479 = vadd.xlane.f32.xlu0 %v478
        %v480 = vpop.xlane.xlu0 %479
        %v481 = vadd.f32 %v446, %v448
        %v482 = vadd.f32 %v481, %v450
        %483 = vadd.xlane.f32.xlu0 %v482
        %v484 = vpop.xlane.xlu0 %483
        %v485 = vadd.f32 %v452, %v454
        %v486 = vadd.f32 %v485, %v456
        %487 = vadd.xlane.f32.xlu0 %v486
        %v488 = vpop.xlane.xlu0 %487
        %v489 = vlog2.pop %v460
        %v490 = vmul.f32 %v489, 0.6931472
        %v491 = vlog2.pop %v464
        %v492 = vmul.f32 %v491, 0.6931472
        %v493 = vlog2.pop %v468
        %v494 = vmul.f32 %v493, 0.6931472
        %v495 = vlog2.pop %v472
        %v496 = vmul.f32 %v495, 0.6931472
        %v497 = vlog2.pop %v476
        %v498 = vmul.f32 %v497, 0.6931472
        %v499 = vlog2.pop %v480
        %v500 = vmul.f32 %v499, 0.6931472
        %v501 = vlog2.pop %v484
        %v502 = vmul.f32 %v501, 0.6931472
        %v503 = vlog2.pop %v488
        %v504 = vmul.f32 %v503, 0.6931472
        %v505 = vlaneseq
        %v506 = vand.u32 %v505, 127
        %v507 = vadd.s32 %v506, 128
        %v508 = vadd.s32 %v506, 256
        %509 = vset.pattern.permute.xlu0 0
        %510 = vperm.xlu0 %509, %v345
        %v511 = vpop.permute.xlu0 %510
        %512 = vset.pattern.permute.xlu0 0
        %513 = vperm.xlu0 %512, %v346
        %v514 = vpop.permute.xlu0 %513
        %515 = vset.pattern.permute.xlu0 0
        %516 = vperm.xlu0 %515, %v347
        %v517 = vpop.permute.xlu0 %516
        %518 = vset.pattern.permute.xlu0 0
        %519 = vperm.xlu0 %518, %v348
        %v520 = vpop.permute.xlu0 %519
        %521 = vset.pattern.permute.xlu0 0
        %522 = vperm.xlu0 %521, %v349
        %v523 = vpop.permute.xlu0 %522
        %524 = vset.pattern.permute.xlu0 0
        %525 = vperm.xlu0 %524, %v350
        %v526 = vpop.permute.xlu0 %525
        %527 = vset.pattern.permute.xlu0 0
        %528 = vperm.xlu0 %527, %v351
        %v529 = vpop.permute.xlu0 %528
        %530 = vset.pattern.permute.xlu0 0
        %531 = vperm.xlu0 %530, %v352
        %v532 = vpop.permute.xlu0 %531
        %vm533 = vcmp.eq.s32.totalorder %v506, %v511
        %vm534 = vcmp.eq.s32.totalorder %v507, %v511
        %vm535 = vcmp.eq.s32.totalorder %v508, %v511
        %vm536 = vcmp.eq.s32.totalorder %v506, %v514
        %vm537 = vcmp.eq.s32.totalorder %v507, %v514
        %vm538 = vcmp.eq.s32.totalorder %v508, %v514
        %vm539 = vcmp.eq.s32.totalorder %v506, %v517
        %vm540 = vcmp.eq.s32.totalorder %v507, %v517
        %vm541 = vcmp.eq.s32.totalorder %v508, %v517
        %vm542 = vcmp.eq.s32.totalorder %v506, %v520
        %vm543 = vcmp.eq.s32.totalorder %v507, %v520
        %vm544 = vcmp.eq.s32.totalorder %v508, %v520
        %vm545 = vcmp.eq.s32.totalorder %v506, %v523
        %vm546 = vcmp.eq.s32.totalorder %v507, %v523
        %vm547 = vcmp.eq.s32.totalorder %v508, %v523
        %vm548 = vcmp.eq.s32.totalorder %v506, %v526
        %vm549 = vcmp.eq.s32.totalorder %v507, %v526
        %vm550 = vcmp.eq.s32.totalorder %v508, %v526
        %vm551 = vcmp.eq.s32.totalorder %v506, %v529
        %vm552 = vcmp.eq.s32.totalorder %v507, %v529
        %vm553 = vcmp.eq.s32.totalorder %v508, %v529
        %vm554 = vcmp.eq.s32.totalorder %v506, %v532
        %vm555 = vcmp.eq.s32.totalorder %v507, %v532
        %vm556 = vcmp.eq.s32.totalorder %v508, %v532
        %v557 = vsel %vm533, %v297, 0.0
        %v558 = vsel %vm534, %v298, 0.0
        %v559 = vsel %vm535, %v299, 0.0
        %v560 = vsel %vm536, %v300, 0.0
        %v561 = vsel %vm537, %v301, 0.0
        %v562 = vsel %vm538, %v302, 0.0
        %v563 = vsel %vm539, %v303, 0.0
        %v564 = vsel %vm540, %v304, 0.0
        %v565 = vsel %vm541, %v305, 0.0
        %v566 = vsel %vm542, %v306, 0.0
        %v567 = vsel %vm543, %v307, 0.0
        %v568 = vsel %vm544, %v308, 0.0
        %v569 = vsel %vm545, %v309, 0.0
        %v570 = vsel %vm546, %v310, 0.0
        %v571 = vsel %vm547, %v311, 0.0
        %v572 = vsel %vm548, %v312, 0.0
        %v573 = vsel %vm549, %v313, 0.0
        %v574 = vsel %vm550, %v314, 0.0
        %v575 = vsel %vm551, %v315, 0.0
        %v576 = vsel %vm552, %v316, 0.0
        %v577 = vsel %vm553, %v317, 0.0
        %v578 = vsel %vm554, %v318, 0.0
        %v579 = vsel %vm555, %v319, 0.0
        %v580 = vsel %vm556, %v320, 0.0
        %v581 = vadd.f32 %v557, %v558
        %v582 = vadd.f32 %v581, %v559
        %583 = vadd.xlane.f32.xlu0 %v582
        %v584 = vpop.xlane.xlu0 %583
        %v585 = vadd.f32 %v560, %v561
        %v586 = vadd.f32 %v585, %v562
        %587 = vadd.xlane.f32.xlu0 %v586
        %v588 = vpop.xlane.xlu0 %587
        %v589 = vadd.f32 %v563, %v564
        %v590 = vadd.f32 %v589, %v565
        %591 = vadd.xlane.f32.xlu0 %v590
        %v592 = vpop.xlane.xlu0 %591
        %v593 = vadd.f32 %v566, %v567
        %v594 = vadd.f32 %v593, %v568
        %595 = vadd.xlane.f32.xlu0 %v594
        %v596 = vpop.xlane.xlu0 %595
        %v597 = vadd.f32 %v569, %v570
        %v598 = vadd.f32 %v597, %v571
        %599 = vadd.xlane.f32.xlu0 %v598
        %v600 = vpop.xlane.xlu0 %599
        %v601 = vadd.f32 %v572, %v573
        %v602 = vadd.f32 %v601, %v574
        %603 = vadd.xlane.f32.xlu0 %v602
        %v604 = vpop.xlane.xlu0 %603
        %v605 = vadd.f32 %v575, %v576
        %v606 = vadd.f32 %v605, %v577
        %607 = vadd.xlane.f32.xlu0 %v606
        %v608 = vpop.xlane.xlu0 %607
        %v609 = vadd.f32 %v578, %v579
        %v610 = vadd.f32 %v609, %v580
        %611 = vadd.xlane.f32.xlu0 %v610
        %v612 = vpop.xlane.xlu0 %611
        %v613 = vadd.f32 %v356, %v490
        %v614 = vadd.f32 %v360, %v492
        %v615 = vadd.f32 %v364, %v494
        %v616 = vadd.f32 %v368, %v496
        %v617 = vadd.f32 %v372, %v498
        %v618 = vadd.f32 %v376, %v500
        %v619 = vadd.f32 %v380, %v502
        %v620 = vadd.f32 %v384, %v504
        %v621 = vsub.f32 %v613, %v584
        %v622 = vsub.f32 %v614, %v588
        %v623 = vsub.f32 %v615, %v592
        %v624 = vsub.f32 %v616, %v596
        %v625 = vsub.f32 %v617, %v600
        %v626 = vsub.f32 %v618, %v604
        %v627 = vsub.f32 %v619, %v608
        %v628 = vsub.f32 %v620, %v612
        %v629 = vmul.f32 %v385, 0.5
        %v630 = vmul.f32 %v386, 0.5
        %v631 = vmul.f32 %v387, 0.5
        %v632 = vmul.f32 %v388, 0.5
        %v633 = vmul.f32 %v389, 0.5
        %v634 = vmul.f32 %v390, 0.5
        %v635 = vmul.f32 %v391, 0.5
        %v636 = vmul.f32 %v392, 0.5
        %v637 = vmul.f32 %v393, 0.5
        %v638 = vmul.f32 %v394, 0.5
        %v639 = vmul.f32 %v395, 0.5
        %v640 = vmul.f32 %v396, 0.5
        %v641 = vmul.f32 %v397, 0.5
        %v642 = vmul.f32 %v398, 0.5
        %v643 = vmul.f32 %v399, 0.5
        %v644 = vmul.f32 %v400, 0.5
        %v645 = vmul.f32 %v401, 0.5
        %v646 = vmul.f32 %v402, 0.5
        %v647 = vmul.f32 %v403, 0.5
        %v648 = vmul.f32 %v404, 0.5
        %v649 = vmul.f32 %v405, 0.5
        %v650 = vmul.f32 %v406, 0.5
        %v651 = vmul.f32 %v407, 0.5
        %v652 = vmul.f32 %v408, 0.5
        %v653 = vmul.f32 %v629, 1.442695
        %v654 = vpow.pop %v653
        %v655 = vmul.f32 %v630, 1.442695
        %v656 = vpow.pop %v655
        %v657 = vmul.f32 %v631, 1.442695
        %v658 = vpow.pop %v657
        %v659 = vmul.f32 %v632, 1.442695
        %v660 = vpow.pop %v659
        %v661 = vmul.f32 %v633, 1.442695
        %v662 = vpow.pop %v661
        %v663 = vmul.f32 %v634, 1.442695
        %v664 = vpow.pop %v663
        %v665 = vmul.f32 %v635, 1.442695
        %v666 = vpow.pop %v665
        %v667 = vmul.f32 %v636, 1.442695
        %v668 = vpow.pop %v667
        %v669 = vmul.f32 %v637, 1.442695
        %v670 = vpow.pop %v669
        %v671 = vmul.f32 %v638, 1.442695
        %v672 = vpow.pop %v671
        %v673 = vmul.f32 %v639, 1.442695
        %v674 = vpow.pop %v673
        %v675 = vmul.f32 %v640, 1.442695
        %v676 = vpow.pop %v675
        %v677 = vmul.f32 %v641, 1.442695
        %v678 = vpow.pop %v677
        %v679 = vmul.f32 %v642, 1.442695
        %v680 = vpow.pop %v679
        %v681 = vmul.f32 %v643, 1.442695
        %v682 = vpow.pop %v681
        %v683 = vmul.f32 %v644, 1.442695
        %v684 = vpow.pop %v683
        %v685 = vmul.f32 %v645, 1.442695
        %v686 = vpow.pop %v685
        %v687 = vmul.f32 %v646, 1.442695
        %v688 = vpow.pop %v687
        %v689 = vmul.f32 %v647, 1.442695
        %v690 = vpow.pop %v689
        %v691 = vmul.f32 %v648, 1.442695
        %v692 = vpow.pop %v691
        %v693 = vmul.f32 %v649, 1.442695
        %v694 = vpow.pop %v693
        %v695 = vmul.f32 %v650, 1.442695
        %v696 = vpow.pop %v695
        %v697 = vmul.f32 %v651, 1.442695
        %v698 = vpow.pop %v697
        %v699 = vmul.f32 %v652, 1.442695
        %v700 = vpow.pop %v699
        %v701 = vadd.f32 %v654, %v656
        %v702 = vadd.f32 %v701, %v658
        %703 = vadd.xlane.f32.xlu0 %v702
        %v704 = vpop.xlane.xlu0 %703
        %v705 = vadd.f32 %v660, %v662
        %v706 = vadd.f32 %v705, %v664
        %707 = vadd.xlane.f32.xlu0 %v706
        %v708 = vpop.xlane.xlu0 %707
        %v709 = vadd.f32 %v666, %v668
        %v710 = vadd.f32 %v709, %v670
        %711 = vadd.xlane.f32.xlu0 %v710
        %v712 = vpop.xlane.xlu0 %711
        %v713 = vadd.f32 %v672, %v674
        %v714 = vadd.f32 %v713, %v676
        %715 = vadd.xlane.f32.xlu0 %v714
        %v716 = vpop.xlane.xlu0 %715
        %v717 = vadd.f32 %v678, %v680
        %v718 = vadd.f32 %v717, %v682
        %719 = vadd.xlane.f32.xlu0 %v718
        %v720 = vpop.xlane.xlu0 %719
        %v721 = vadd.f32 %v684, %v686
        %v722 = vadd.f32 %v721, %v688
        %723 = vadd.xlane.f32.xlu0 %v722
        %v724 = vpop.xlane.xlu0 %723
        %v725 = vadd.f32 %v690, %v692
        %v726 = vadd.f32 %v725, %v694
        %727 = vadd.xlane.f32.xlu0 %v726
        %v728 = vpop.xlane.xlu0 %727
        %v729 = vadd.f32 %v696, %v698
        %v730 = vadd.f32 %v729, %v700
        %731 = vadd.xlane.f32.xlu0 %v730
        %v732 = vpop.xlane.xlu0 %731
        %v733 = vlog2.pop %v704
        %v734 = vmul.f32 %v733, 0.6931472
        %v735 = vlog2.pop %v708
        %v736 = vmul.f32 %v735, 0.6931472
        %v737 = vlog2.pop %v712
        %v738 = vmul.f32 %v737, 0.6931472
        %v739 = vlog2.pop %v716
        %v740 = vmul.f32 %v739, 0.6931472
        %v741 = vlog2.pop %v720
        %v742 = vmul.f32 %v741, 0.6931472
        %v743 = vlog2.pop %v724
        %v744 = vmul.f32 %v743, 0.6931472
        %v745 = vlog2.pop %v728
        %v746 = vmul.f32 %v745, 0.6931472
        %v747 = vlog2.pop %v732
        %v748 = vmul.f32 %v747, 0.6931472
        %v749 = vsub.f32 %v629, %v734
        %v750 = vsub.f32 %v630, %v734
        %v751 = vsub.f32 %v631, %v734
        %v752 = vsub.f32 %v632, %v736
        %v753 = vsub.f32 %v633, %v736
        %v754 = vsub.f32 %v634, %v736
        %v755 = vsub.f32 %v635, %v738
        %v756 = vsub.f32 %v636, %v738
        %v757 = vsub.f32 %v637, %v738
        %v758 = vsub.f32 %v638, %v740
        %v759 = vsub.f32 %v639, %v740
        %v760 = vsub.f32 %v640, %v740
        %v761 = vsub.f32 %v641, %v742
        %v762 = vsub.f32 %v642, %v742
        %v763 = vsub.f32 %v643, %v742
        %v764 = vsub.f32 %v644, %v744
        %v765 = vsub.f32 %v645, %v744
        %v766 = vsub.f32 %v646, %v744
        %v767 = vsub.f32 %v647, %v746
        %v768 = vsub.f32 %v648, %v746
        %v769 = vsub.f32 %v649, %v746
        %v770 = vsub.f32 %v650, %v748
        %v771 = vsub.f32 %v651, %v748
        %v772 = vsub.f32 %v652, %v748
        %v773 = vmax.f32 %v321, %v322
        %v774 = vmax.f32 %v773, %v323
        %775 = vmax.xlane.f32.xlu0 %v774
        %v776 = vpop.xlane.xlu0 %775
        %v777 = vmax.f32 %v324, %v325
        %v778 = vmax.f32 %v777, %v326
        %779 = vmax.xlane.f32.xlu0 %v778
        %v780 = vpop.xlane.xlu0 %779
        %v781 = vmax.f32 %v327, %v328
        %v782 = vmax.f32 %v781, %v329
        %783 = vmax.xlane.f32.xlu0 %v782
        %v784 = vpop.xlane.xlu0 %783
        %v785 = vmax.f32 %v330, %v331
        %v786 = vmax.f32 %v785, %v332
        %787 = vmax.xlane.f32.xlu0 %v786
        %v788 = vpop.xlane.xlu0 %787
        %v789 = vmax.f32 %v333, %v334
        %v790 = vmax.f32 %v789, %v335
        %791 = vmax.xlane.f32.xlu0 %v790
        %v792 = vpop.xlane.xlu0 %791
        %v793 = vmax.f32 %v336, %v337
        %v794 = vmax.f32 %v793, %v338
        %795 = vmax.xlane.f32.xlu0 %v794
        %v796 = vpop.xlane.xlu0 %795
        %v797 = vmax.f32 %v339, %v340
        %v798 = vmax.f32 %v797, %v341
        %799 = vmax.xlane.f32.xlu0 %v798
        %v800 = vpop.xlane.xlu0 %799
        %v801 = vmax.f32 %v342, %v343
        %v802 = vmax.f32 %v801, %v344
        %803 = vmax.xlane.f32.xlu0 %v802
        %v804 = vpop.xlane.xlu0 %803
        %v805 = vsub.f32 %v321, %v776
        %v806 = vsub.f32 %v322, %v776
        %v807 = vsub.f32 %v323, %v776
        %v808 = vsub.f32 %v324, %v780
        %v809 = vsub.f32 %v325, %v780
        %v810 = vsub.f32 %v326, %v780
        %v811 = vsub.f32 %v327, %v784
        %v812 = vsub.f32 %v328, %v784
        %v813 = vsub.f32 %v329, %v784
        %v814 = vsub.f32 %v330, %v788
        %v815 = vsub.f32 %v331, %v788
        %v816 = vsub.f32 %v332, %v788
        %v817 = vsub.f32 %v333, %v792
        %v818 = vsub.f32 %v334, %v792
        %v819 = vsub.f32 %v335, %v792
        %v820 = vsub.f32 %v336, %v796
        %v821 = vsub.f32 %v337, %v796
        %v822 = vsub.f32 %v338, %v796
        %v823 = vsub.f32 %v339, %v800
        %v824 = vsub.f32 %v340, %v800
        %v825 = vsub.f32 %v341, %v800
        %v826 = vsub.f32 %v342, %v804
        %v827 = vsub.f32 %v343, %v804
        %v828 = vsub.f32 %v344, %v804
        %v829 = vmul.f32 %v805, 0.5
        %v830 = vmul.f32 %v806, 0.5
        %v831 = vmul.f32 %v807, 0.5
        %v832 = vmul.f32 %v808, 0.5
        %v833 = vmul.f32 %v809, 0.5
        %v834 = vmul.f32 %v810, 0.5
        %v835 = vmul.f32 %v811, 0.5
        %v836 = vmul.f32 %v812, 0.5
        %v837 = vmul.f32 %v813, 0.5
        %v838 = vmul.f32 %v814, 0.5
        %v839 = vmul.f32 %v815, 0.5
        %v840 = vmul.f32 %v816, 0.5
        %v841 = vmul.f32 %v817, 0.5
        %v842 = vmul.f32 %v818, 0.5
        %v843 = vmul.f32 %v819, 0.5
        %v844 = vmul.f32 %v820, 0.5
        %v845 = vmul.f32 %v821, 0.5
        %v846 = vmul.f32 %v822, 0.5
        %v847 = vmul.f32 %v823, 0.5
        %v848 = vmul.f32 %v824, 0.5
        %v849 = vmul.f32 %v825, 0.5
        %v850 = vmul.f32 %v826, 0.5
        %v851 = vmul.f32 %v827, 0.5
        %v852 = vmul.f32 %v828, 0.5
        %v853 = vmul.f32 %v829, 1.442695
        %v854 = vpow.pop %v853
        %v855 = vmul.f32 %v830, 1.442695
        %v856 = vpow.pop %v855
        %v857 = vmul.f32 %v831, 1.442695
        %v858 = vpow.pop %v857
        %v859 = vmul.f32 %v832, 1.442695
        %v860 = vpow.pop %v859
        %v861 = vmul.f32 %v833, 1.442695
        %v862 = vpow.pop %v861
        %v863 = vmul.f32 %v834, 1.442695
        %v864 = vpow.pop %v863
        %v865 = vmul.f32 %v835, 1.442695
        %v866 = vpow.pop %v865
        %v867 = vmul.f32 %v836, 1.442695
        %v868 = vpow.pop %v867
        %v869 = vmul.f32 %v837, 1.442695
        %v870 = vpow.pop %v869
        %v871 = vmul.f32 %v838, 1.442695
        %v872 = vpow.pop %v871
        %v873 = vmul.f32 %v839, 1.442695
        %v874 = vpow.pop %v873
        %v875 = vmul.f32 %v840, 1.442695
        %v876 = vpow.pop %v875
        %v877 = vmul.f32 %v841, 1.442695
        %v878 = vpow.pop %v877
        %v879 = vmul.f32 %v842, 1.442695
        %v880 = vpow.pop %v879
        %v881 = vmul.f32 %v843, 1.442695
        %v882 = vpow.pop %v881
        %v883 = vmul.f32 %v844, 1.442695
        %v884 = vpow.pop %v883
        %v885 = vmul.f32 %v845, 1.442695
        %v886 = vpow.pop %v885
        %v887 = vmul.f32 %v846, 1.442695
        %v888 = vpow.pop %v887
        %v889 = vmul.f32 %v847, 1.442695
        %v890 = vpow.pop %v889
        %v891 = vmul.f32 %v848, 1.442695
        %v892 = vpow.pop %v891
        %v893 = vmul.f32 %v849, 1.442695
        %v894 = vpow.pop %v893
        %v895 = vmul.f32 %v850, 1.442695
        %v896 = vpow.pop %v895
        %v897 = vmul.f32 %v851, 1.442695
        %v898 = vpow.pop %v897
        %v899 = vmul.f32 %v852, 1.442695
        %v900 = vpow.pop %v899
        %v901 = vadd.f32 %v854, %v856
        %v902 = vadd.f32 %v901, %v858
        %903 = vadd.xlane.f32.xlu0 %v902
        %v904 = vpop.xlane.xlu0 %903
        %v905 = vadd.f32 %v860, %v862
        %v906 = vadd.f32 %v905, %v864
        %907 = vadd.xlane.f32.xlu0 %v906
        %v908 = vpop.xlane.xlu0 %907
        %v909 = vadd.f32 %v866, %v868
        %v910 = vadd.f32 %v909, %v870
        %911 = vadd.xlane.f32.xlu0 %v910
        %v912 = vpop.xlane.xlu0 %911
        %v913 = vadd.f32 %v872, %v874
        %v914 = vadd.f32 %v913, %v876
        %915 = vadd.xlane.f32.xlu0 %v914
        %v916 = vpop.xlane.xlu0 %915
        %v917 = vadd.f32 %v878, %v880
        %v918 = vadd.f32 %v917, %v882
        %919 = vadd.xlane.f32.xlu0 %v918
        %v920 = vpop.xlane.xlu0 %919
        %v921 = vadd.f32 %v884, %v886
        %v922 = vadd.f32 %v921, %v888
        %923 = vadd.xlane.f32.xlu0 %v922
        %v924 = vpop.xlane.xlu0 %923
        %v925 = vadd.f32 %v890, %v892
        %v926 = vadd.f32 %v925, %v894
        %927 = vadd.xlane.f32.xlu0 %v926
        %v928 = vpop.xlane.xlu0 %927
        %v929 = vadd.f32 %v896, %v898
        %v930 = vadd.f32 %v929, %v900
        %931 = vadd.xlane.f32.xlu0 %v930
        %v932 = vpop.xlane.xlu0 %931
        %v933 = vlog2.pop %v904
        %v934 = vmul.f32 %v933, 0.6931472
        %v935 = vlog2.pop %v908
        %v936 = vmul.f32 %v935, 0.6931472
        %v937 = vlog2.pop %v912
        %v938 = vmul.f32 %v937, 0.6931472
        %v939 = vlog2.pop %v916
        %v940 = vmul.f32 %v939, 0.6931472
        %v941 = vlog2.pop %v920
        %v942 = vmul.f32 %v941, 0.6931472
        %v943 = vlog2.pop %v924
        %v944 = vmul.f32 %v943, 0.6931472
        %v945 = vlog2.pop %v928
        %v946 = vmul.f32 %v945, 0.6931472
        %v947 = vlog2.pop %v932
        %v948 = vmul.f32 %v947, 0.6931472
        %v949 = vsub.f32 %v829, %v934
        %v950 = vsub.f32 %v830, %v934
        %v951 = vsub.f32 %v831, %v934
        %v952 = vsub.f32 %v832, %v936
        %v953 = vsub.f32 %v833, %v936
        %v954 = vsub.f32 %v834, %v936
        %v955 = vsub.f32 %v835, %v938
        %v956 = vsub.f32 %v836, %v938
        %v957 = vsub.f32 %v837, %v938
        %v958 = vsub.f32 %v838, %v940
        %v959 = vsub.f32 %v839, %v940
        %v960 = vsub.f32 %v840, %v940
        %v961 = vsub.f32 %v841, %v942
        %v962 = vsub.f32 %v842, %v942
        %v963 = vsub.f32 %v843, %v942
        %v964 = vsub.f32 %v844, %v944
        %v965 = vsub.f32 %v845, %v944
        %v966 = vsub.f32 %v846, %v944
        %v967 = vsub.f32 %v847, %v946
        %v968 = vsub.f32 %v848, %v946
        %v969 = vsub.f32 %v849, %v946
        %v970 = vsub.f32 %v850, %v948
        %v971 = vsub.f32 %v851, %v948
        %v972 = vsub.f32 %v852, %v948
        %v973 = vsub.f32 %v949, %v749
        %v974 = vsub.f32 %v950, %v750
        %v975 = vsub.f32 %v951, %v751
        %v976 = vsub.f32 %v952, %v752
        %v977 = vsub.f32 %v953, %v753
        %v978 = vsub.f32 %v954, %v754
        %v979 = vsub.f32 %v955, %v755
        %v980 = vsub.f32 %v956, %v756
        %v981 = vsub.f32 %v957, %v757
        %v982 = vsub.f32 %v958, %v758
        %v983 = vsub.f32 %v959, %v759
        %v984 = vsub.f32 %v960, %v760
        %v985 = vsub.f32 %v961, %v761
        %v986 = vsub.f32 %v962, %v762
        %v987 = vsub.f32 %v963, %v763
        %v988 = vsub.f32 %v964, %v764
        %v989 = vsub.f32 %v965, %v765
        %v990 = vsub.f32 %v966, %v766
        %v991 = vsub.f32 %v967, %v767
        %v992 = vsub.f32 %v968, %v768
        %v993 = vsub.f32 %v969, %v769
        %v994 = vsub.f32 %v970, %v770
        %v995 = vsub.f32 %v971, %v771
        %v996 = vsub.f32 %v972, %v772
        %v997 = vmul.f32 %v854, %v973
        %v998 = vmul.f32 %v856, %v974
        %v999 = vmul.f32 %v858, %v975
        %v1000 = vmul.f32 %v860, %v976
        %v1001 = vmul.f32 %v862, %v977
        %v1002 = vmul.f32 %v864, %v978
        %v1003 = vmul.f32 %v866, %v979
        %v1004 = vmul.f32 %v868, %v980
        %v1005 = vmul.f32 %v870, %v981
        %v1006 = vmul.f32 %v872, %v982
        %v1007 = vmul.f32 %v874, %v983
        %v1008 = vmul.f32 %v876, %v984
        %v1009 = vmul.f32 %v878, %v985
        %v1010 = vmul.f32 %v880, %v986
        %v1011 = vmul.f32 %v882, %v987
        %v1012 = vmul.f32 %v884, %v988
        %v1013 = vmul.f32 %v886, %v989
        %v1014 = vmul.f32 %v888, %v990
        %v1015 = vmul.f32 %v890, %v991
        %v1016 = vmul.f32 %v892, %v992
        %v1017 = vmul.f32 %v894, %v993
        %v1018 = vmul.f32 %v896, %v994
        %v1019 = vmul.f32 %v898, %v995
        %v1020 = vmul.f32 %v900, %v996
        %v1021 = vadd.f32 %v997, %v998
        %v1022 = vadd.f32 %v1021, %v999
        %1023 = vadd.xlane.f32.xlu0 %v1022
        %v1024 = vpop.xlane.xlu0 %1023
        %v1025 = vadd.f32 %v1000, %v1001
        %v1026 = vadd.f32 %v1025, %v1002
        %1027 = vadd.xlane.f32.xlu0 %v1026
        %v1028 = vpop.xlane.xlu0 %1027
        %v1029 = vadd.f32 %v1003, %v1004
        %v1030 = vadd.f32 %v1029, %v1005
        %1031 = vadd.xlane.f32.xlu0 %v1030
        %v1032 = vpop.xlane.xlu0 %1031
        %v1033 = vadd.f32 %v1006, %v1007
        %v1034 = vadd.f32 %v1033, %v1008
        %1035 = vadd.xlane.f32.xlu0 %v1034
        %v1036 = vpop.xlane.xlu0 %1035
        %v1037 = vadd.f32 %v1009, %v1010
        %v1038 = vadd.f32 %v1037, %v1011
        %1039 = vadd.xlane.f32.xlu0 %v1038
        %v1040 = vpop.xlane.xlu0 %1039
        %v1041 = vadd.f32 %v1012, %v1013
        %v1042 = vadd.f32 %v1041, %v1014
        %1043 = vadd.xlane.f32.xlu0 %v1042
        %v1044 = vpop.xlane.xlu0 %1043
        %v1045 = vadd.f32 %v1015, %v1016
        %v1046 = vadd.f32 %v1045, %v1017
        %1047 = vadd.xlane.f32.xlu0 %v1046
        %v1048 = vpop.xlane.xlu0 %1047
        %v1049 = vadd.f32 %v1018, %v1019
        %v1050 = vadd.f32 %v1049, %v1020
        %1051 = vadd.xlane.f32.xlu0 %v1050
        %v1052 = vpop.xlane.xlu0 %1051
        %v1053 = vrcp.pop %v904
        %v1054 = vmul.f32 %v904, %v1053
        %v1055 = vsub.f32 1.0, %v1054
        %v1056 = vmul.f32 %v1053, %v1055
        %v1057 = vadd.f32 %v1053, %v1056
        %vm1058 = vweird.f32 %v904
        %vm1059 = vweird.f32 %v1053
        %vm1060 = vmor %vm1058, %vm1059
        %v1061 = vsel %vm1060, %v1053, %v1057
        %v1062 = vand.u32 2147483647, %v904
        %vm1063 = vcmp.eq.f32.partialorder %v1062, 8.507059e+37
        %v1064 = vand.u32 %v904, 2147483648
        %v1065 = vor.u32 1.1754944e-38, %v1064
        %v1066 = vsel %vm1063, %v1065, %v1061
        %v1067 = vrcp.pop %v908
        %v1068 = vmul.f32 %v908, %v1067
        %v1069 = vsub.f32 1.0, %v1068
        %v1070 = vmul.f32 %v1067, %v1069
        %v1071 = vadd.f32 %v1067, %v1070
        %vm1072 = vweird.f32 %v908
        %vm1073 = vweird.f32 %v1067
        %vm1074 = vmor %vm1072, %vm1073
        %v1075 = vsel %vm1074, %v1067, %v1071
        %v1076 = vand.u32 2147483647, %v908
        %vm1077 = vcmp.eq.f32.partialorder %v1076, 8.507059e+37
        %v1078 = vand.u32 %v908, 2147483648
        %v1079 = vor.u32 1.1754944e-38, %v1078
        %v1080 = vsel %vm1077, %v1079, %v1075
        %v1081 = vrcp.pop %v912
        %v1082 = vmul.f32 %v912, %v1081
        %v1083 = vsub.f32 1.0, %v1082
        %v1084 = vmul.f32 %v1081, %v1083
        %v1085 = vadd.f32 %v1081, %v1084
        %vm1086 = vweird.f32 %v912
        %vm1087 = vweird.f32 %v1081
        %vm1088 = vmor %vm1086, %vm1087
        %v1089 = vsel %vm1088, %v1081, %v1085
        %v1090 = vand.u32 2147483647, %v912
        %vm1091 = vcmp.eq.f32.partialorder %v1090, 8.507059e+37
        %v1092 = vand.u32 %v912, 2147483648
        %v1093 = vor.u32 1.1754944e-38, %v1092
        %v1094 = vsel %vm1091, %v1093, %v1089
        %v1095 = vrcp.pop %v916
        %v1096 = vmul.f32 %v916, %v1095
        %v1097 = vsub.f32 1.0, %v1096
        %v1098 = vmul.f32 %v1095, %v1097
        %v1099 = vadd.f32 %v1095, %v1098
        %vm1100 = vweird.f32 %v916
        %vm1101 = vweird.f32 %v1095
        %vm1102 = vmor %vm1100, %vm1101
        %v1103 = vsel %vm1102, %v1095, %v1099
        %v1104 = vand.u32 2147483647, %v916
        %vm1105 = vcmp.eq.f32.partialorder %v1104, 8.507059e+37
        %v1106 = vand.u32 %v916, 2147483648
        %v1107 = vor.u32 1.1754944e-38, %v1106
        %v1108 = vsel %vm1105, %v1107, %v1103
        %v1109 = vrcp.pop %v920
        %v1110 = vmul.f32 %v920, %v1109
        %v1111 = vsub.f32 1.0, %v1110
        %v1112 = vmul.f32 %v1109, %v1111
        %v1113 = vadd.f32 %v1109, %v1112
        %vm1114 = vweird.f32 %v920
        %vm1115 = vweird.f32 %v1109
        %vm1116 = vmor %vm1114, %vm1115
        %v1117 = vsel %vm1116, %v1109, %v1113
        %v1118 = vand.u32 2147483647, %v920
        %vm1119 = vcmp.eq.f32.partialorder %v1118, 8.507059e+37
        %v1120 = vand.u32 %v920, 2147483648
        %v1121 = vor.u32 1.1754944e-38, %v1120
        %v1122 = vsel %vm1119, %v1121, %v1117
        %v1123 = vrcp.pop %v924
        %v1124 = vmul.f32 %v924, %v1123
        %v1125 = vsub.f32 1.0, %v1124
        %v1126 = vmul.f32 %v1123, %v1125
        %v1127 = vadd.f32 %v1123, %v1126
        %vm1128 = vweird.f32 %v924
        %vm1129 = vweird.f32 %v1123
        %vm1130 = vmor %vm1128, %vm1129
        %v1131 = vsel %vm1130, %v1123, %v1127
        %v1132 = vand.u32 2147483647, %v924
        %vm1133 = vcmp.eq.f32.partialorder %v1132, 8.507059e+37
        %v1134 = vand.u32 %v924, 2147483648
        %v1135 = vor.u32 1.1754944e-38, %v1134
        %v1136 = vsel %vm1133, %v1135, %v1131
        %v1137 = vrcp.pop %v928
        %v1138 = vmul.f32 %v928, %v1137
        %v1139 = vsub.f32 1.0, %v1138
        %v1140 = vmul.f32 %v1137, %v1139
        %v1141 = vadd.f32 %v1137, %v1140
        %vm1142 = vweird.f32 %v928
        %vm1143 = vweird.f32 %v1137
        %vm1144 = vmor %vm1142, %vm1143
        %v1145 = vsel %vm1144, %v1137, %v1141
        %v1146 = vand.u32 2147483647, %v928
        %vm1147 = vcmp.eq.f32.partialorder %v1146, 8.507059e+37
        %v1148 = vand.u32 %v928, 2147483648
        %v1149 = vor.u32 1.1754944e-38, %v1148
        %v1150 = vsel %vm1147, %v1149, %v1145
        %v1151 = vrcp.pop %v932
        %v1152 = vmul.f32 %v932, %v1151
        %v1153 = vsub.f32 1.0, %v1152
        %v1154 = vmul.f32 %v1151, %v1153
        %v1155 = vadd.f32 %v1151, %v1154
        %vm1156 = vweird.f32 %v932
        %vm1157 = vweird.f32 %v1151
        %vm1158 = vmor %vm1156, %vm1157
        %v1159 = vsel %vm1158, %v1151, %v1155
        %v1160 = vand.u32 2147483647, %v932
        %vm1161 = vcmp.eq.f32.partialorder %v1160, 8.507059e+37
        %v1162 = vand.u32 %v932, 2147483648
        %v1163 = vor.u32 1.1754944e-38, %v1162
        %v1164 = vsel %vm1161, %v1163, %v1159
        %v1165 = vmul.f32 %v1024, %v1066
        %v1166 = vmul.f32 %v1028, %v1080
        %v1167 = vmul.f32 %v1032, %v1094
        %v1168 = vmul.f32 %v1036, %v1108
        %v1169 = vmul.f32 %v1040, %v1122
        %v1170 = vmul.f32 %v1044, %v1136
        %v1171 = vmul.f32 %v1048, %v1150
        %v1172 = vmul.f32 %v1052, %v1164
        %s1173 = smul.u32 %s28, 64
        %v1174 = vlaneseq
        %v1175 = vshrl.u32 %v1174, 7
        %v1176 = vadd.s32 %v1175, 8
        %v1177 = vadd.s32 %v1175, 16
        %v1178 = vadd.s32 %v1175, 24
        %v1179 = vadd.s32 %v1175, 32
        %v1180 = vadd.s32 %v1175, 40
        %v1181 = vadd.s32 %v1175, 48
        %v1182 = vadd.s32 %v1175, 56
        %v1183 = vstv %s1173
        %v1184 = vadd.s32 %v1183, %v1175
        %v1185 = vadd.s32 %v1183, %v1176
        %v1186 = vadd.s32 %v1183, %v1177
        %v1187 = vadd.s32 %v1183, %v1178
        %v1188 = vadd.s32 %v1183, %v1179
        %v1189 = vadd.s32 %v1183, %v1180
        %v1190 = vadd.s32 %v1183, %v1181
        %v1191 = vadd.s32 %v1183, %v1182
        %vm1192 = vcmp.lt.s32.totalorder %v1184, 100
        %vm1193 = vcmp.lt.s32.totalorder %v1185, 100
        %vm1194 = vcmp.lt.s32.totalorder %v1186, 100
        %vm1195 = vcmp.lt.s32.totalorder %v1187, 100
        %vm1196 = vcmp.lt.s32.totalorder %v1188, 100
        %vm1197 = vcmp.lt.s32.totalorder %v1189, 100
        %vm1198 = vcmp.lt.s32.totalorder %v1190, 100
        %vm1199 = vcmp.lt.s32.totalorder %v1191, 100
        %v1200 = vsel %vm1192, 1, 0
        %v1201 = vsel %vm1193, 1, 0
        %v1202 = vsel %vm1194, 1, 0
        %v1203 = vsel %vm1195, 1, 0
        %v1204 = vsel %vm1196, 1, 0
        %v1205 = vsel %vm1197, 1, 0
        %v1206 = vsel %vm1198, 1, 0
        %v1207 = vsel %vm1199, 1, 0
        %v1208 = vcvt.s32.f32 %v1200
        %v1209 = vcvt.s32.f32 %v1201
        %v1210 = vcvt.s32.f32 %v1202
        %v1211 = vcvt.s32.f32 %v1203
        %v1212 = vcvt.s32.f32 %v1204
        %v1213 = vcvt.s32.f32 %v1205
        %v1214 = vcvt.s32.f32 %v1206
        %v1215 = vcvt.s32.f32 %v1207
        %v1216 = vmul.f32 %v621, %v1208
        %v1217 = vmul.f32 %v622, %v1209
        %v1218 = vmul.f32 %v623, %v1210
        %v1219 = vmul.f32 %v624, %v1211
        %v1220 = vmul.f32 %v625, %v1212
        %v1221 = vmul.f32 %v626, %v1213
        %v1222 = vmul.f32 %v627, %v1214
        %v1223 = vmul.f32 %v628, %v1215
        %vm1224 = vcmask 7168
        %v1225 = vsel %vm1224, %v1216, 0.0
        %v1226 = vsel %vm1224, %v1217, 0.0
        %v1227 = vadd.f32 %v1225, %v1226
        %v1228 = vsel %vm1224, %v1218, 0.0
        %v1229 = vadd.f32 %v1227, %v1228
        %v1230 = vsel %vm1224, %v1219, 0.0
        %v1231 = vadd.f32 %v1229, %v1230
        %v1232 = vsel %vm1224, %v1220, 0.0
        %v1233 = vadd.f32 %v1231, %v1232
        %v1234 = vsel %vm1224, %v1221, 0.0
        %v1235 = vadd.f32 %v1233, %v1234
        %v1236 = vsel %vm1224, %v1222, 0.0
        %v1237 = vadd.f32 %v1235, %v1236
        %v1238 = vsel %vm1224, %v1223, 0.0
        %v1239 = vadd.f32 %v1237, %v1238
        %1240 = vadd.xlane.f32.xlu0 %v1239
        %v1241 = vpop.xlane.xlu0 %1240
        %v1242 = vrot.slane %v1241, 4
        %v1243 = vadd.f32 %v1241, %v1242
        %v1244 = vrot.slane %v1243, 2
        %v1245 = vadd.f32 %v1243, %v1244
        %v1246 = vrot.slane %v1245, 1
        %v1247 = vadd.f32 %v1245, %v1246
        %s1248 = vtos %v1247
        %v1249 = vmul.f32 %v1165, %v1208
        %v1250 = vmul.f32 %v1166, %v1209
        %v1251 = vmul.f32 %v1167, %v1210
        %v1252 = vmul.f32 %v1168, %v1211
        %v1253 = vmul.f32 %v1169, %v1212
        %v1254 = vmul.f32 %v1170, %v1213
        %v1255 = vmul.f32 %v1171, %v1214
        %v1256 = vmul.f32 %v1172, %v1215
        %v1257 = vsel %vm1224, %v1249, 0.0
        %v1258 = vsel %vm1224, %v1250, 0.0
        %v1259 = vadd.f32 %v1257, %v1258
        %v1260 = vsel %vm1224, %v1251, 0.0
        %v1261 = vadd.f32 %v1259, %v1260
        %v1262 = vsel %vm1224, %v1252, 0.0
        %v1263 = vadd.f32 %v1261, %v1262
        %v1264 = vsel %vm1224, %v1253, 0.0
        %v1265 = vadd.f32 %v1263, %v1264
        %v1266 = vsel %vm1224, %v1254, 0.0
        %v1267 = vadd.f32 %v1265, %v1266
        %v1268 = vsel %vm1224, %v1255, 0.0
        %v1269 = vadd.f32 %v1267, %v1268
        %v1270 = vsel %vm1224, %v1256, 0.0
        %v1271 = vadd.f32 %v1269, %v1270
        %1272 = vadd.xlane.f32.xlu0 %v1271
        %v1273 = vpop.xlane.xlu0 %1272
        %v1274 = vrot.slane %v1273, 4
        %v1275 = vadd.f32 %v1273, %v1274
        %v1276 = vrot.slane %v1275, 2
        %v1277 = vadd.f32 %v1275, %v1276
        %v1278 = vrot.slane %v1277, 1
        %v1279 = vadd.f32 %v1277, %v1278
        %s1280 = vtos %v1279
        %v1281 = vstv %s1248
        %1282 = vst [vmem:[%s281] sm:$0xff] %v1281
        %v1283 = vstv %s1280
        %1284 = vst [vmem:[%s288] sm:$0xff] %v1283
        %s1285 = sand.u32 %s114, 1
        %s1286 = scalar_lea.sflag [#allocation4], %s1285
        %s1287 = sand.u32 %s114, 1
        %s1288 = smul.addr %s1287, 8
        %s1289 = scalar_lea.vmem [#allocation7], %s1288
        %s1290 = sand.u32 %s140, 1
        %s1291 = scalar_lea.sflag [#allocation9], %s1290
        %s1292 = sand.u32 %s140, 1
        %s1293 = smul.addr %s1292, 8
        %s1294 = scalar_lea.vmem [#allocation8], %s1293
        // Predicated region
        $region41: #{tpu_custom_call.1} parent=31 // pred_check
          %p1295 = pneg %p124
        $region42: #{tpu_custom_call.1} parent=31 // pred_check_branch
          %1297 = sbr.rel (%p1295) target = $region44
        $region43: #{tpu_custom_call.1} parent=31 // pred_region
          %1299 = vsyncadd %s1286, 0
          %s1300 = smul.addr %s28, 8
          %s1301 = scalar_lea.hbm %s3, %s1300
          %s1303 = sshll.u32 %s1289, 4
          %s1304 = int_to_ptr.vmem [resolvable:$true] %s1303
          %s1305 = sshll.u32 %s1301, 4
          %s1306 = int_to_ptr.hbm [resolvable:$true] %s1305
          %1308 = dma.vmem_to_hbm [thread:$0]  %s1304, 128, %s1306, %s1286
        $region44: #{tpu_custom_call.1} parent=31 // pred_fallthru
          _
        // Predicated region
        $region45: #{tpu_custom_call.1} parent=31 // pred_check
          %p1309 = pneg %p150
        $region46: #{tpu_custom_call.1} parent=31 // pred_check_branch
          %1311 = sbr.rel (%p1309) target = $region48
        $region47: #{tpu_custom_call.1} parent=31 // pred_region
          %1313 = vsyncadd %s1291, 0
          %s1314 = smul.addr %s28, 8
          %s1315 = scalar_lea.hbm %s4, %s1314
          %s1317 = sshll.u32 %s1294, 4
          %s1318 = int_to_ptr.vmem [resolvable:$true] %s1317
          %s1319 = sshll.u32 %s1315, 4
          %s1320 = int_to_ptr.hbm [resolvable:$true] %s1319
          %1322 = dma.vmem_to_hbm [thread:$0]  %s1318, 128, %s1320, %s1291
        $region48: #{tpu_custom_call.1} parent=31 // pred_fallthru
          _
      $region32: #{tpu_custom_call.1} parent=5 // pred_fallthru
        _
      %p1323 = scmp.le.s32.totalorder 2, %s23
      // Predicated region
      $region49: #{tpu_custom_call.1} parent=5 // pred_check
        %p1324 = pneg %p1323
      $region50: #{tpu_custom_call.1} parent=5 // pred_check_branch
        %1326 = sbr.rel (%p1324) target = $region52
      $region51: #{tpu_custom_call.1} parent=5 // pred_region
        %s1327 = ssub.s32 %s23, 2
        // Predicated region
        $region53: #{tpu_custom_call.1} parent=51 // pred_check
          %p1328 = pneg %p130
        $region54: #{tpu_custom_call.1} parent=51 // pred_check_branch
          %1330 = sbr.rel (%p1328) target = $region56
        $region55: #{tpu_custom_call.1} parent=51 // pred_region
          %s1331 = sand.u32 %s115, 1
          %s1332 = scalar_lea.sflag [#allocation4], %s1331
          %s1333 = sand.u32 %s115, 1
          %s1334 = smul.addr %s1333, 8
          %s1335 = scalar_lea.vmem [#allocation7], %s1334
          %1337 = dma.done %s1332, 128
        $region56: #{tpu_custom_call.1} parent=51 // pred_fallthru
          _
        // Predicated region
        $region57: #{tpu_custom_call.1} parent=51 // pred_check
          %p1338 = pneg %p156
        $region58: #{tpu_custom_call.1} parent=51 // pred_check_branch
          %1340 = sbr.rel (%p1338) target = $region60
        $region59: #{tpu_custom_call.1} parent=51 // pred_region
          %s1341 = sand.u32 %s141, 1
          %s1342 = scalar_lea.sflag [#allocation9], %s1341
          %s1343 = sand.u32 %s141, 1
          %s1344 = smul.addr %s1343, 8
          %s1345 = scalar_lea.vmem [#allocation8], %s1344
          %1347 = dma.done %s1342, 128
        $region60: #{tpu_custom_call.1} parent=51 // pred_fallthru
          _
      $region52: #{tpu_custom_call.1} parent=5 // pred_fallthru
        _
    $region6: #{tpu_custom_call.1} parent=1 // loop_footer
      %s27 = sadd.s32 1, %s23
    $region7: #{tpu_custom_call.1} parent=1 // loop_footer_branch
      %22 = sbr.rel target = $region3
    $region8: #{tpu_custom_call.1} parent=1 // loop_exit
      _
    %1348 = vsyncpa [#allocation3], 1
    %s1349 = scalar_lea.sflag [#allocation3], 1
    %1350 = vsyncpa %s1349, 1
    %1351 = vsyncpa [#allocation6], 1
    %s1352 = scalar_lea.sflag [#allocation6], 1
    %1353 = vsyncpa %s1352, 1
    %1354 = vsyncpa [#allocation4], 1
    %s1355 = scalar_lea.sflag [#allocation4], 1
    %1356 = vsyncpa %s1355, 1
    %1357 = vsyncpa [#allocation9], 1
    %s1358 = scalar_lea.sflag [#allocation9], 1
    %1359 = vsyncpa %s1358, 1

</llo_original>
